<compile_context>
chip_gen: v7x
topology: tpu7x:2x2x1
jax: 0.10.0
libtpu: 0.0.40
codegen_flags: <defaults>
</compile_context>

<pallas_src>
import jax
import jax.numpy as jnp
from jax.experimental import pallas as pl
from jax.experimental.pallas import tpu as pltpu


def _round_up(n, m):
    return ((n + m - 1) // m) * m


def _pad_axis(a, axis, new_size):
    pad = new_size - a.shape[axis]
    if pad == 0:
        return a
    widths = [(0, 0)] * a.ndim
    widths[axis] = (0, pad)
    return jnp.pad(a, widths)


def _vmem_capacity_bytes():
    try:
        return int(pltpu.get_tpu_info().vmem_capacity_bytes)
    except Exception:
        return 64 << 20  # conservative fallback: v7x per-TensorCore VMEM


def _sae_kernel(x_ref, we_ref, be_ref, wd_ref, bd_ref, out_ref, rho_ref,
                acc_ref):
    """One (batch-tile i, latent-chunk l) grid step.

    x_ref   : (TB, Dp)   bf16  input tile (constant across l)
    we_ref  : (Dp, TL)   bf16  encoder weight chunk, (in, out) layout
    be_ref  : (1, TL)    f32   encoder bias chunk
    wd_ref  : (TL, Dp)   bf16  decoder weight chunk, (in, out) layout
    bd_ref  : (1, Dp)    f32   decoder bias (constant)
    out_ref : (TB, Dp)   out-dtype decoder output tile (revisited across l)
    rho_ref : (1, 1, TL) f32   per-(tile, chunk) partial sum of h
    acc_ref : (TB, Dp)   f32   decoder accumulator scratch
    """
    l = pl.program_id(1)
    n_l = pl.num_programs(1)

    # Encoder chunk: plain (M, K) x (K, N) matmul -> MXU, f32 accumulate.
    pre_h = jnp.dot(x_ref[...], we_ref[...],
                    preferred_element_type=jnp.float32)          # (TB, TL)
    # sigmoid(z) == 0.5 * (tanh(z / 2) + 1): one EUP transcendental.
    h = 0.5 * (jnp.tanh(0.5 * (pre_h + be_ref[...])) + 1.0)

    # data_rho partial sum (unmasked; padded batch rows are corrected exactly
    # in the wrapper, so no iota/compare/select in the hot loop).
    rho_ref[...] = jnp.sum(h, axis=0, keepdims=True)[None]

    # Decoder: accumulate h_chunk @ Wd_chunk over latent chunks (f32 scratch).
    contrib = jnp.dot(h.astype(wd_ref.dtype), wd_ref[...],
                      preferred_element_type=jnp.float32)        # (TB, Dp)

    @pl.when(l == 0)
    def _init():
        acc_ref[...] = jnp.zeros_like(acc_ref)

    acc = acc_ref[...] + contrib

    @pl.when(l < n_l - 1)
    def _carry():
        acc_ref[...] = acc

    @pl.when(l == n_l - 1)
    def _finalize():
        out_ref[...] = jnp.tanh(acc + bd_ref[...]).astype(out_ref.dtype)


def sparse_autoencoder_forward(x, W_e, b_e, W_d, b_d, *,
                               out_dtype=jnp.float32,
                               max_tile_b=None, tile_b=None, tile_l=None):
    """x: (B, input_dim). W_e: (latent, input_dim), b_e: (latent,),
    W_d: (input_dim, latent), b_d: (input_dim,)  (PyTorch Linear layout).
    Returns (out, data_rho) with shapes (B, input_dim) and (latent,)."""
    B, D = x.shape
    L = W_e.shape[0]

    Dp = _round_up(D, 128)
    Lp = _round_up(L, 128)
    out_bytes = jnp.dtype(out_dtype).itemsize

    # ---- generation-aware capacity & tile selection -------------------------
    vmem_cap = _vmem_capacity_bytes()
    big_vmem = vmem_cap > (64 << 20)                 # v5e/v6e: 128 MiB VMEM
    vmem_budget = (100 << 20) if big_vmem else (48 << 20)

    def footprint(tb, tl, single_buf):
        gl = pl.cdiv(Lp, tl)
        nb_w = 1 if (gl == 1 and single_buf) else 2
        f = 2 * tb * Dp * 2                          # x tile (bf16, 2 bufs)
        f += nb_w * 2 * tl * Dp * 2                  # We + Wd chunks (bf16)
        f += nb_w * 8 * tl * 4 + 8 * Dp * 4          # be chunk + bd (padded)
        f += 2 * tb * Dp * out_bytes                 # out tile (2 bufs)
        f += 2 * 8 * tl * 4                          # rho partial
        f += tb * Dp * 4                             # decoder acc scratch
        f += tb * tl * 12 + tb * Dp * 8              # pre_h/h/h_bf16 + tails
        return f

    if tile_b is not None:
        TB = _round_up(max(16, min(tile_b, _round_up(B, 16))), 16)
    else:
        tb_cap = max_tile_b if max_tile_b is not None else (512 if big_vmem else 256)
        # >= 2 batch tiles whenever B > 16: shards the "parallel" axis across
        # v7x's two TensorCores and gives the pipeline something to overlap.
        n_tiles = max(2, pl.cdiv(B, tb_cap))
        TB = _round_up(pl.cdiv(B, n_tiles), 16)

    if tile_l is not None:
        TL = _round_up(max(128, min(tile_l, Lp)), 128)
    else:
        TL = Lp
        while TL > 128 and footprint(TB, TL, True) > vmem_budget:
            TL = _round_up(TL // 2, 128)
        while (tile_b is None and TB > 16
               and footprint(TB, TL, True) > vmem_budget):
            TB = _round_up(TB // 2, 16)

    grid_b = pl.cdiv(B, TB)
    grid_l = pl.cdiv(Lp, TL)
    Bp = grid_b * TB
    Lpp = grid_l * TL

    # ---- glue: pad + one-time transpose to MXU-native layout + bf16 cast ----
    # (In production the weights would be transposed/padded once at init.)
    xp = _pad_axis(_pad_axis(jnp.asarray(x, jnp.float32), 0, Bp), 1,
                   Dp).astype(jnp.bfloat16)
    we = _pad_axis(_pad_axis(jnp.asarray(W_e, jnp.float32).T, 0, Dp), 1,
                   Lpp).astype(jnp.bfloat16)                      # (Dp, Lpp)
    wd = _pad_axis(_pad_axis(jnp.asarray(W_d, jnp.float32).T, 0, Lpp), 1,
                   Dp).astype(jnp.bfloat16)                       # (Lpp, Dp)
    be_f32 = jnp.asarray(b_e, jnp.float32)
    bd_f32 = jnp.asarray(b_d, jnp.float32)
    be = _pad_axis(be_f32.reshape(1, L), 1, Lpp)
    bd = _pad_axis(bd_f32.reshape(1, D), 1, Dp)

    weight_bytes = (we.size + wd.size) * 2
    cost = pl.CostEstimate(
        flops=4 * Bp * Dp * Lpp,                      # two matmuls
        transcendentals=Bp * (Lpp + Dp),              # sigmoid(tanh) + tanh
        bytes_accessed=(xp.size * 2
                        + weight_bytes * (grid_b if grid_l > 1 else 1)
                        + be.size * 4 + bd.size * 4
                        + Bp * Dp * out_bytes + grid_b * Lpp * 4),
    )

    def build(single_buf):
        def wspec(shape, imap):
            # Resident (constant-index) weights/bias chunks: single buffer.
            if single_buf and grid_l == 1:
                return pl.BlockSpec(shape, imap, pipeline_mode=pl.Buffered(1))
            return pl.BlockSpec(shape, imap)

        def cspec(shape, imap):
            # Always-constant operand (decoder bias).
            if single_buf:
                return pl.BlockSpec(shape, imap, pipeline_mode=pl.Buffered(1))
            return pl.BlockSpec(shape, imap)

        fp = footprint(TB, TL, single_buf)
        vmem_limit = int(min(max(int(fp * 1.25), 24 << 20), vmem_budget))

        return pl.pallas_call(
            _sae_kernel,
            grid=(grid_b, grid_l),
            in_specs=[
                pl.BlockSpec((TB, Dp), lambda i, l: (i, 0)),     # x: batch tile
                wspec((Dp, TL), lambda i, l: (0, l)),            # W_e^T chunk
                wspec((1, TL), lambda i, l: (0, l)),             # b_e chunk
                wspec((TL, Dp), lambda i, l: (l, 0)),            # W_d^T chunk
                cspec((1, Dp), lambda i, l: (0, 0)),             # b_d
            ],
            out_specs=(
                pl.BlockSpec((TB, Dp), lambda i, l: (i, 0)),     # out tile
                pl.BlockSpec((1, 1, TL), lambda i, l: (i, 0, l)),  # rho partials
            ),
            out_shape=(
                jax.ShapeDtypeStruct((Bp, Dp), out_dtype),
                jax.ShapeDtypeStruct((grid_b, 1, Lpp), jnp.float32),
            ),
            scratch_shapes=[pltpu.VMEM((TB, Dp), jnp.float32)],
            compiler_params=pltpu.CompilerParams(
                dimension_semantics=("parallel", "arbitrary"),
                vmem_limit_bytes=vmem_limit,
            ),
            cost_estimate=cost,
        )

    try:
        out_p, rho_parts = build(single_buf=True)(xp, we, be, wd, bd)
    except Exception:
        # pipeline_mode=pl.Buffered(1) may be unsupported by the installed
        # JAX; fall back to default double-buffering (identical semantics).
        out_p, rho_parts = build(single_buf=False)(xp, we, be, wd, bd)

    # Finish data_rho: sum the per-(tile, chunk) partials, remove the exact
    # contribution of padded batch rows (x == 0 -> h == sigmoid(b_e)), and
    # divide by the true batch size.
    rho_sum = jnp.sum(rho_parts, axis=(0, 1))[:L]
    if Bp > B:
        rho_sum = rho_sum - (Bp - B) * (0.5 * (jnp.tanh(0.5 * be_f32) + 1.0))
    data_rho = rho_sum / float(B)

    out = out_p[:B, :D]
    return out, data_rho


def _init_linear(key, out_dim, in_dim):
    # Deterministic init mimicking PyTorch nn.Linear: U(-1/sqrt(in), 1/sqrt(in)).
    k_w, k_b = jax.random.split(key)
    bound = 1.0 / jnp.sqrt(float(in_dim))
    W = jax.random.uniform(k_w, (out_dim, in_dim), jnp.float32, -bound, bound)
    b = jax.random.uniform(k_b, (out_dim,), jnp.float32, -bound, bound)
    return W, b


def _reference(x, W_e, b_e, W_d, b_d):
    h = jax.nn.sigmoid(x @ W_e.T + b_e)
    return jnp.tanh(h @ W_d.T + b_d), h.mean(axis=0)


if __name__ == "__main__":
    key = jax.random.PRNGKey(0)
    k_x, k_e, k_d, k_x2, k_e2, k_d2 = jax.random.split(key, 6)

    # Case 1: small shapes matching the module (single latent chunk, resident
    # single-buffered weights).
    batch, input_dim, latent_size = 8, 32, 16
    x = jax.random.normal(k_x, (batch, input_dim), jnp.float32)
    W_e, b_e = _init_linear(k_e, latent_size, input_dim)   # Encoder.fc1
    W_d, b_d = _init_linear(k_d, input_dim, latent_size)   # Decoder.fc1

    out, data_rho = sparse_autoencoder_forward(x, W_e, b_e, W_d, b_d)
    jax.block_until_ready((out, data_rho))
    out_ref, rho_ref = _reference(x, W_e, b_e, W_d, b_d)
    assert out.shape == (batch, input_dim)
    assert data_rho.shape == (latent_size,)
    assert jnp.allclose(out, out_ref, atol=2e-2, rtol=2e-2), "decoder mismatch"
    assert jnp.allclose(data_rho, rho_ref, atol=2e-2, rtol=2e-2), "rho mismatch"

    # Case 2: exercise the multi-tile paths at small shapes (>=2 batch tiles,
    # 2 latent chunks -> decoder accumulation, batch/latent padding + rho fix).
    b2, d2, l2 = 40, 64, 200
    x2 = jax.random.normal(k_x2, (b2, d2), jnp.float32)
    W_e2, b_e2 = _init_linear(k_e2, l2, d2)
    W_d2, b_d2 = _init_linear(k_d2, d2, l2)
    out2, rho2 = sparse_autoencoder_forward(x2, W_e2, b_e2, W_d2, b_d2,
                                            tile_b=16, tile_l=128)
    jax.block_until_ready((out2, rho2))
    out2_ref, rho2_ref = _reference(x2, W_e2, b_e2, W_d2, b_d2)
    assert jnp.allclose(out2, out2_ref, atol=2e-2, rtol=2e-2), \
        "decoder mismatch (tiled)"
    assert jnp.allclose(rho2, rho2_ref, atol=2e-2, rtol=2e-2), \
        "rho mismatch (tiled)"

    print("KERNEL_OK")
</pallas_src>

<mosaic_0001>
module attributes {stable_mosaic.version = 11 : i64} {
  func.func @_sae_kernel(%arg0: i32, %arg1: i32, %arg2: memref<16x128xbf16, #tpu.memory_space<vmem>>, %arg3: memref<128x128xbf16, #tpu.memory_space<vmem>>, %arg4: memref<1x128xf32, #tpu.memory_space<vmem>>, %arg5: memref<128x128xbf16, #tpu.memory_space<vmem>>, %arg6: memref<1x128xf32, #tpu.memory_space<vmem>>, %arg7: memref<16x128xf32, #tpu.memory_space<vmem>>, %arg8: memref<1x1x128xf32, #tpu.memory_space<vmem>>, %arg9: memref<16x128xf32, #tpu.memory_space<vmem>>) attributes {dimension_semantics = [#tpu.dimension_semantics<parallel>, #tpu.dimension_semantics<arbitrary>], iteration_bounds = array<i64: 1, 1>, scalar_prefetch = 0 : i64, scratch_operands = 1 : i64, tpu.core_type = #tpu.core_type<tc>, window_params = [{transform_indices = @transform_0, window_bounds = array<i64: 16, 128>}, {pipeline_mode = #tpu.pipeline_mode<synchronous>, transform_indices = @transform_1, window_bounds = array<i64: 128, 128>}, {pipeline_mode = #tpu.pipeline_mode<synchronous>, transform_indices = @transform_2, window_bounds = array<i64: 1, 128>}, {pipeline_mode = #tpu.pipeline_mode<synchronous>, transform_indices = @transform_3, window_bounds = array<i64: 128, 128>}, {pipeline_mode = #tpu.pipeline_mode<synchronous>, transform_indices = @transform_4, window_bounds = array<i64: 1, 128>}, {transform_indices = @transform_5, window_bounds = array<i64: 16, 128>}, {transform_indices = @transform_6, window_bounds = array<i64: 1, 1, 128>}]} {
    %c0 = arith.constant 0 : index
    %c0_0 = arith.constant 0 : index
    %0 = vector.load %arg2[%c0, %c0_0] : memref<16x128xbf16, #tpu.memory_space<vmem>>, vector<16x128xbf16>
    %c0_1 = arith.constant 0 : index
    %c0_2 = arith.constant 0 : index
    %1 = vector.load %arg3[%c0_1, %c0_2] : memref<128x128xbf16, #tpu.memory_space<vmem>>, vector<128x128xbf16>
    %cst = arith.constant dense<0.000000e+00> : vector<16x128xf32>
    %2 = tpu.matmul %0, %1, %cst {dimension_numbers = #tpu.dot_dimension_numbers<[1], [0], [0], [1], [0, 0, 1, 1], [], []>} : vector<16x128xbf16>, vector<128x128xbf16>, vector<16x128xf32> -> vector<16x128xf32>
    %c0_3 = arith.constant 0 : index
    %c0_4 = arith.constant 0 : index
    %3 = vector.load %arg4[%c0_3, %c0_4] : memref<1x128xf32, #tpu.memory_space<vmem>>, vector<1x128xf32>
    %4 = vector.broadcast %3 : vector<1x128xf32> to vector<16x128xf32>
    %5 = arith.addf %2, %4 : vector<16x128xf32>
    %cst_5 = arith.constant 5.000000e-01 : f32
    %6 = vector.broadcast %cst_5 : f32 to vector<16x128xf32>
    %7 = arith.mulf %6, %5 : vector<16x128xf32>
    %8 = math.tanh %7 : vector<16x128xf32>
    %cst_6 = arith.constant 1.000000e+00 : f32
    %9 = vector.broadcast %cst_6 : f32 to vector<16x128xf32>
    %10 = arith.addf %8, %9 : vector<16x128xf32>
    %cst_7 = arith.constant 5.000000e-01 : f32
    %11 = vector.broadcast %cst_7 : f32 to vector<16x128xf32>
    %12 = arith.mulf %11, %10 : vector<16x128xf32>
    %cst_8 = arith.constant dense<0.000000e+00> : vector<128xf32>
    %13 = vector.multi_reduction <add>, %12, %cst_8 [0] : vector<16x128xf32> to vector<128xf32>
    %14 = vector.shape_cast %13 : vector<128xf32> to vector<1x128xf32>
    %15 = vector.shape_cast %14 : vector<1x128xf32> to vector<1x1x128xf32>
    %c0_9 = arith.constant 0 : index
    %c0_10 = arith.constant 0 : index
    %c0_11 = arith.constant 0 : index
    %16 = vector.load %arg8[%c0_9, %c0_10, %c0_11] : memref<1x1x128xf32, #tpu.memory_space<vmem>>, vector<1x1x128xf32>
    tpu.vector_store %arg8[%c0_9, %c0_10, %c0_11], %15 {strides = array<i32>} : memref<1x1x128xf32, #tpu.memory_space<vmem>>, vector<1x1x128xf32>,
    %17 = arith.truncf %12 : vector<16x128xf32> to vector<16x128xbf16>
    %c0_12 = arith.constant 0 : index
    %c0_13 = arith.constant 0 : index
    %18 = vector.load %arg5[%c0_12, %c0_13] : memref<128x128xbf16, #tpu.memory_space<vmem>>, vector<128x128xbf16>
    %cst_14 = arith.constant dense<0.000000e+00> : vector<16x128xf32>
    %19 = tpu.matmul %17, %18, %cst_14 {dimension_numbers = #tpu.dot_dimension_numbers<[1], [0], [0], [1], [0, 0, 1, 1], [], []>} : vector<16x128xbf16>, vector<128x128xbf16>, vector<16x128xf32> -> vector<16x128xf32>
    %c0_i32 = arith.constant 0 : i32
    %20 = arith.cmpi eq, %arg1, %c0_i32 : i32
    %21 = arith.extui %20 : i1 to i32
    %c0_i32_15 = arith.constant 0 : i32
    %22 = arith.cmpi ne, %21, %c0_i32_15 : i32
    scf.if %22 {
      %cst_22 = arith.constant 0.000000e+00 : f32
      %31 = vector.broadcast %cst_22 : f32 to vector<16x128xf32>
      %c0_23 = arith.constant 0 : index
      %c0_24 = arith.constant 0 : index
      %32 = vector.load %arg9[%c0_23, %c0_24] : memref<16x128xf32, #tpu.memory_space<vmem>>, vector<16x128xf32>
      tpu.vector_store %arg9[%c0_23, %c0_24], %31 {strides = array<i32>} : memref<16x128xf32, #tpu.memory_space<vmem>>, vector<16x128xf32>,
    } else {
    }
    %c0_16 = arith.constant 0 : index
    %c0_17 = arith.constant 0 : index
    %23 = vector.load %arg9[%c0_16, %c0_17] : memref<16x128xf32, #tpu.memory_space<vmem>>, vector<16x128xf32>
    %24 = arith.addf %23, %19 : vector<16x128xf32>
    %c0_i32_18 = arith.constant 0 : i32
    %25 = arith.cmpi slt, %arg1, %c0_i32_18 : i32
    %26 = arith.extui %25 : i1 to i32
    %c0_i32_19 = arith.constant 0 : i32
    %27 = arith.cmpi ne, %26, %c0_i32_19 : i32
    scf.if %27 {
      %c0_22 = arith.constant 0 : index
      %c0_23 = arith.constant 0 : index
      %31 = vector.load %arg9[%c0_22, %c0_23] : memref<16x128xf32, #tpu.memory_space<vmem>>, vector<16x128xf32>
      tpu.vector_store %arg9[%c0_22, %c0_23], %24 {strides = array<i32>} : memref<16x128xf32, #tpu.memory_space<vmem>>, vector<16x128xf32>,
    } else {
    }
    %c0_i32_20 = arith.constant 0 : i32
    %28 = arith.cmpi eq, %arg1, %c0_i32_20 : i32
    %29 = arith.extui %28 : i1 to i32
    %c0_i32_21 = arith.constant 0 : i32
    %30 = arith.cmpi ne, %29, %c0_i32_21 : i32
    scf.if %30 {
      %c0_22 = arith.constant 0 : index
      %c0_23 = arith.constant 0 : index
      %31 = vector.load %arg6[%c0_22, %c0_23] : memref<1x128xf32, #tpu.memory_space<vmem>>, vector<1x128xf32>
      %32 = vector.broadcast %31 : vector<1x128xf32> to vector<16x128xf32>
      %33 = arith.addf %24, %32 : vector<16x128xf32>
      %34 = math.tanh %33 : vector<16x128xf32>
      %c0_24 = arith.constant 0 : index
      %c0_25 = arith.constant 0 : index
      %35 = vector.load %arg7[%c0_24, %c0_25] : memref<16x128xf32, #tpu.memory_space<vmem>>, vector<16x128xf32>
      tpu.vector_store %arg7[%c0_24, %c0_25], %34 {strides = array<i32>} : memref<16x128xf32, #tpu.memory_space<vmem>>, vector<16x128xf32>,
    } else {
    }
    return
  }
  func.func @transform_0(%arg0: i32, %arg1: i32) -> (i32, i32) {
    %c0_i32 = arith.constant 0 : i32
    %c0_i32_0 = arith.constant 0 : i32
    return %arg0, %c0_i32 : i32, i32
  }
  func.func @transform_1(%arg0: i32, %arg1: i32) -> (i32, i32) {
    %c0_i32 = arith.constant 0 : i32
    %c0_i32_0 = arith.constant 0 : i32
    return %c0_i32, %arg1 : i32, i32
  }
  func.func @transform_2(%arg0: i32, %arg1: i32) -> (i32, i32) {
    %c0_i32 = arith.constant 0 : i32
    %c0_i32_0 = arith.constant 0 : i32
    return %c0_i32, %arg1 : i32, i32
  }
  func.func @transform_3(%arg0: i32, %arg1: i32) -> (i32, i32) {
    %c0_i32 = arith.constant 0 : i32
    %c0_i32_0 = arith.constant 0 : i32
    return %arg1, %c0_i32 : i32, i32
  }
  func.func @transform_4(%arg0: i32, %arg1: i32) -> (i32, i32) {
    %c0_i32 = arith.constant 0 : i32
    %c0_i32_0 = arith.constant 0 : i32
    %c0_i32_1 = arith.constant 0 : i32
    return %c0_i32, %c0_i32_0 : i32, i32
  }
  func.func @transform_5(%arg0: i32, %arg1: i32) -> (i32, i32) {
    %c0_i32 = arith.constant 0 : i32
    %c0_i32_0 = arith.constant 0 : i32
    return %arg0, %c0_i32 : i32, i32
  }
  func.func @transform_6(%arg0: i32, %arg1: i32) -> (i32, i32, i32) {
    %c0_i32 = arith.constant 0 : i32
    %c0_i32_0 = arith.constant 0 : i32
    return %arg0, %c0_i32, %arg1 : i32, i32, i32
  }
}

module attributes {stable_mosaic.version = 11 : i64} {
  func.func @_sae_kernel(%arg0: i32, %arg1: i32, %arg2: memref<16x128xbf16, #tpu.memory_space<vmem>>, %arg3: memref<128x128xbf16, #tpu.memory_space<vmem>>, %arg4: memref<1x128xf32, #tpu.memory_space<vmem>>, %arg5: memref<128x128xbf16, #tpu.memory_space<vmem>>, %arg6: memref<1x128xf32, #tpu.memory_space<vmem>>, %arg7: memref<16x128xf32, #tpu.memory_space<vmem>>, %arg8: memref<1x1x128xf32, #tpu.memory_space<vmem>>, %arg9: memref<16x128xf32, #tpu.memory_space<vmem>>) attributes {dimension_semantics = [#tpu.dimension_semantics<parallel>, #tpu.dimension_semantics<arbitrary>], iteration_bounds = array<i64: 1, 1>, scalar_prefetch = 0 : i64, scratch_operands = 1 : i64, tpu.core_type = #tpu.core_type<tc>, window_params = [{transform_indices = @transform_0, window_bounds = array<i64: 16, 128>}, {transform_indices = @transform_1, window_bounds = array<i64: 128, 128>}, {transform_indices = @transform_2, window_bounds = array<i64: 1, 128>}, {transform_indices = @transform_3, window_bounds = array<i64: 128, 128>}, {pipeline_mode = #tpu.pipeline_mode<synchronous>, transform_indices = @transform_4, window_bounds = array<i64: 1, 128>}, {transform_indices = @transform_5, window_bounds = array<i64: 16, 128>}, {transform_indices = @transform_6, window_bounds = array<i64: 1, 1, 128>}]} {
    %c0 = arith.constant 0 : index
    %c0_0 = arith.constant 0 : index
    %0 = vector.load %arg2[%c0, %c0_0] : memref<16x128xbf16, #tpu.memory_space<vmem>>, vector<16x128xbf16>
    %c0_1 = arith.constant 0 : index
    %c0_2 = arith.constant 0 : index
    %1 = vector.load %arg3[%c0_1, %c0_2] : memref<128x128xbf16, #tpu.memory_space<vmem>>, vector<128x128xbf16>
    %cst = arith.constant dense<0.000000e+00> : vector<16x128xf32>
    %2 = tpu.matmul %0, %1, %cst {dimension_numbers = #tpu.dot_dimension_numbers<[1], [0], [0], [1], [0, 0, 1, 1], [], []>} : vector<16x128xbf16>, vector<128x128xbf16>, vector<16x128xf32> -> vector<16x128xf32>
    %c0_3 = arith.constant 0 : index
    %c0_4 = arith.constant 0 : index
    %3 = vector.load %arg4[%c0_3, %c0_4] : memref<1x128xf32, #tpu.memory_space<vmem>>, vector<1x128xf32>
    %4 = vector.broadcast %3 : vector<1x128xf32> to vector<16x128xf32>
    %5 = arith.addf %2, %4 : vector<16x128xf32>
    %cst_5 = arith.constant 5.000000e-01 : f32
    %6 = vector.broadcast %cst_5 : f32 to vector<16x128xf32>
    %7 = arith.mulf %6, %5 : vector<16x128xf32>
    %8 = math.tanh %7 : vector<16x128xf32>
    %cst_6 = arith.constant 1.000000e+00 : f32
    %9 = vector.broadcast %cst_6 : f32 to vector<16x128xf32>
    %10 = arith.addf %8, %9 : vector<16x128xf32>
    %cst_7 = arith.constant 5.000000e-01 : f32
    %11 = vector.broadcast %cst_7 : f32 to vector<16x128xf32>
    %12 = arith.mulf %11, %10 : vector<16x128xf32>
    %cst_8 = arith.constant dense<0.000000e+00> : vector<128xf32>
    %13 = vector.multi_reduction <add>, %12, %cst_8 [0] : vector<16x128xf32> to vector<128xf32>
    %14 = vector.shape_cast %13 : vector<128xf32> to vector<1x128xf32>
    %15 = vector.shape_cast %14 : vector<1x128xf32> to vector<1x1x128xf32>
    %c0_9 = arith.constant 0 : index
    %c0_10 = arith.constant 0 : index
    %c0_11 = arith.constant 0 : index
    %16 = vector.load %arg8[%c0_9, %c0_10, %c0_11] : memref<1x1x128xf32, #tpu.memory_space<vmem>>, vector<1x1x128xf32>
    tpu.vector_store %arg8[%c0_9, %c0_10, %c0_11], %15 {strides = array<i32>} : memref<1x1x128xf32, #tpu.memory_space<vmem>>, vector<1x1x128xf32>,
    %17 = arith.truncf %12 : vector<16x128xf32> to vector<16x128xbf16>
    %c0_12 = arith.constant 0 : index
    %c0_13 = arith.constant 0 : index
    %18 = vector.load %arg5[%c0_12, %c0_13] : memref<128x128xbf16, #tpu.memory_space<vmem>>, vector<128x128xbf16>
    %cst_14 = arith.constant dense<0.000000e+00> : vector<16x128xf32>
    %19 = tpu.matmul %17, %18, %cst_14 {dimension_numbers = #tpu.dot_dimension_numbers<[1], [0], [0], [1], [0, 0, 1, 1], [], []>} : vector<16x128xbf16>, vector<128x128xbf16>, vector<16x128xf32> -> vector<16x128xf32>
    %c0_i32 = arith.constant 0 : i32
    %20 = arith.cmpi eq, %arg1, %c0_i32 : i32
    %21 = arith.extui %20 : i1 to i32
    %c0_i32_15 = arith.constant 0 : i32
    %22 = arith.cmpi ne, %21, %c0_i32_15 : i32
    scf.if %22 {
      %cst_22 = arith.constant 0.000000e+00 : f32
      %31 = vector.broadcast %cst_22 : f32 to vector<16x128xf32>
      %c0_23 = arith.constant 0 : index
      %c0_24 = arith.constant 0 : index
      %32 = vector.load %arg9[%c0_23, %c0_24] : memref<16x128xf32, #tpu.memory_space<vmem>>, vector<16x128xf32>
      tpu.vector_store %arg9[%c0_23, %c0_24], %31 {strides = array<i32>} : memref<16x128xf32, #tpu.memory_space<vmem>>, vector<16x128xf32>,
    } else {
    }
    %c0_16 = arith.constant 0 : index
    %c0_17 = arith.constant 0 : index
    %23 = vector.load %arg9[%c0_16, %c0_17] : memref<16x128xf32, #tpu.memory_space<vmem>>, vector<16x128xf32>
    %24 = arith.addf %23, %19 : vector<16x128xf32>
    %c0_i32_18 = arith.constant 0 : i32
    %25 = arith.cmpi slt, %arg1, %c0_i32_18 : i32
    %26 = arith.extui %25 : i1 to i32
    %c0_i32_19 = arith.constant 0 : i32
    %27 = arith.cmpi ne, %26, %c0_i32_19 : i32
    scf.if %27 {
      %c0_22 = arith.constant 0 : index
      %c0_23 = arith.constant 0 : index
      %31 = vector.load %arg9[%c0_22, %c0_23] : memref<16x128xf32, #tpu.memory_space<vmem>>, vector<16x128xf32>
      tpu.vector_store %arg9[%c0_22, %c0_23], %24 {strides = array<i32>} : memref<16x128xf32, #tpu.memory_space<vmem>>, vector<16x128xf32>,
    } else {
    }
    %c0_i32_20 = arith.constant 0 : i32
    %28 = arith.cmpi eq, %arg1, %c0_i32_20 : i32
    %29 = arith.extui %28 : i1 to i32
    %c0_i32_21 = arith.constant 0 : i32
    %30 = arith.cmpi ne, %29, %c0_i32_21 : i32
    scf.if %30 {
      %c0_22 = arith.constant 0 : index
      %c0_23 = arith.constant 0 : index
      %31 = vector.load %arg6[%c0_22, %c0_23] : memref<1x128xf32, #tpu.memory_space<vmem>>, vector<1x128xf32>
      %32 = vector.broadcast %31 : vector<1x128xf32> to vector<16x128xf32>
      %33 = arith.addf %24, %32 : vector<16x128xf32>
      %34 = math.tanh %33 : vector<16x128xf32>
      %c0_24 = arith.constant 0 : index
      %c0_25 = arith.constant 0 : index
      %35 = vector.load %arg7[%c0_24, %c0_25] : memref<16x128xf32, #tpu.memory_space<vmem>>, vector<16x128xf32>
      tpu.vector_store %arg7[%c0_24, %c0_25], %34 {strides = array<i32>} : memref<16x128xf32, #tpu.memory_space<vmem>>, vector<16x128xf32>,
    } else {
    }
    return
  }
  func.func @transform_0(%arg0: i32, %arg1: i32) -> (i32, i32) {
    %c0_i32 = arith.constant 0 : i32
    %c0_i32_0 = arith.constant 0 : i32
    return %arg0, %c0_i32 : i32, i32
  }
  func.func @transform_1(%arg0: i32, %arg1: i32) -> (i32, i32) {
    %c0_i32 = arith.constant 0 : i32
    %c0_i32_0 = arith.constant 0 : i32
    return %c0_i32, %arg1 : i32, i32
  }
  func.func @transform_2(%arg0: i32, %arg1: i32) -> (i32, i32) {
    %c0_i32 = arith.constant 0 : i32
    %c0_i32_0 = arith.constant 0 : i32
    return %c0_i32, %arg1 : i32, i32
  }
  func.func @transform_3(%arg0: i32, %arg1: i32) -> (i32, i32) {
    %c0_i32 = arith.constant 0 : i32
    %c0_i32_0 = arith.constant 0 : i32
    return %arg1, %c0_i32 : i32, i32
  }
  func.func @transform_4(%arg0: i32, %arg1: i32) -> (i32, i32) {
    %c0_i32 = arith.constant 0 : i32
    %c0_i32_0 = arith.constant 0 : i32
    %c0_i32_1 = arith.constant 0 : i32
    return %c0_i32, %c0_i32_0 : i32, i32
  }
  func.func @transform_5(%arg0: i32, %arg1: i32) -> (i32, i32) {
    %c0_i32 = arith.constant 0 : i32
    %c0_i32_0 = arith.constant 0 : i32
    return %arg0, %c0_i32 : i32, i32
  }
  func.func @transform_6(%arg0: i32, %arg1: i32) -> (i32, i32, i32) {
    %c0_i32 = arith.constant 0 : i32
    %c0_i32_0 = arith.constant 0 : i32
    return %arg0, %c0_i32, %arg1 : i32, i32, i32
  }
}

</mosaic_0001>

<llo_original>
// kernel: tpu_custom_call.1
$region0: #{tpu_custom_call.1}
  #allocation0 [shape = 'u32[]', space=smem, size = 0x4, offset = 0x4, fixed_abs, tag = 'smem constant byte address 0x4 - core index']
  #allocation1 [shape = 'u32[144,128]{1,0:T(1,128)}', space=vmem, size = 0x12000, scoped, tag = 'internal scratch']
  #allocation2 [shape = 'f32[16,128]{1,0:T(8,128)}', space=vmem, size = 0x2000, scoped, tag = 'scratch operand']
  %s0 = inlined_call_operand.hbm [shape: bf16[16,128], index: 0, kind: input, shape index: {}]
  %s1 = inlined_call_operand.hbm [shape: bf16[128,128], index: 1, kind: input, shape index: {}]
  %s2 = inlined_call_operand.vmem [shape: f32[1,128], index: 2, kind: input, shape index: {}]
  %s3 = inlined_call_operand.hbm [shape: bf16[128,128], index: 3, kind: input, shape index: {}]
  %s4 = inlined_call_operand.vmem [shape: f32[1,128], index: 4, kind: input, shape index: {}]
  %s5 = inlined_call_operand.hbm [shape: f32[16,128], index: 5, kind: output, shape index: {0}]
  %s6 = inlined_call_operand.hbm [shape: f32[1,1,128], index: 6, kind: output, shape index: {1}]
  %7 = xla_tuple %s5, %s6
  %s8 = sld [smem:[#allocation0]]
  $region62: #{tpu_custom_call.1} parent=0
    _
  %s10 = ssub.s32 1, %s8
  %s11 = scalar_select 0, %s10, %s8
  $region1: #{tpu_custom_call.1} parent=0
    #allocation3 [shape = 'u8[4096]{0}', space=vmem, size = 0x1000, scoped, tag = 'input window, operand 0, single buffered']
    #allocation4 [shape = 's32[1]{0}', space=sflag, size = 0x4, scoped, tag = 'scoped memory for tpu_custom_call.1']
    #allocation5 [shape = 's32[1]{0}', space=sflag, size = 0x4, scoped, tag = 'scoped memory for tpu_custom_call.1']
    #allocation6 [shape = 'u8[32768]{0}', space=vmem, size = 0x8000, scoped, tag = 'input window, operand 1, single buffered']
    #allocation7 [shape = 's32[1]{0}', space=sflag, size = 0x4, scoped, tag = 'scoped memory for tpu_custom_call.1']
    #allocation8 [shape = 'u8[32768]{0}', space=vmem, size = 0x8000, scoped, tag = 'input window, operand 3, single buffered']
    #allocation9 [shape = 'u8[8192]{0}', space=vmem, size = 0x2000, scoped, tag = 'output window, operand 0, single buffered']
    #allocation10 [shape = 'u8[512]{0}', space=vmem, size = 0x400, scoped, tag = 'output window, operand 1, single buffered']
    #allocation11 [shape = 's32[1]{0}', space=sflag, size = 0x4, scoped, tag = 'scoped memory for tpu_custom_call.1']
    %12 = vsyncpa [#allocation4], 0
    %13 = vsyncpa [#allocation7], 0
    %14 = vsyncpa [#allocation5], 0
    %15 = vsyncpa [#allocation11], 0
    // Predicated region
    $region2: #{tpu_custom_call.1} parent=1 // pred_check
      _
    $region3: #{tpu_custom_call.1} parent=1 // pred_check_branch
      %17 = sbr.rel (0) target = $region5
    $region4: #{tpu_custom_call.1} parent=1 // pred_region
      %s19 = ssub.s32 128, 128
      %20 = vsyncadd [#allocation4], %s19
      %s21 = sshll.u32 [#allocation3], 4
      %s22 = int_to_ptr.vmem [resolvable:$true] %s21
      %27 = dma.hbm_to_vmem [thread:$0]  %s0, 128, %s22, [#allocation4], 64, 64, 4
    $region5: #{tpu_custom_call.1} parent=1 // pred_fallthru
      _
    // Predicated region
    $region6: #{tpu_custom_call.1} parent=1 // pred_check
      _
    $region7: #{tpu_custom_call.1} parent=1 // pred_check_branch
      %29 = sbr.rel (0) target = $region9
    $region8: #{tpu_custom_call.1} parent=1 // pred_region
      %s31 = ssub.s32 1024, 1024
      %32 = vsyncadd [#allocation7], %s31
      %s33 = sshll.u32 [#allocation6], 4
      %s34 = int_to_ptr.vmem [resolvable:$true] %s33
      %39 = dma.hbm_to_vmem [thread:$0]  %s1, 1024, %s34, [#allocation7], 64, 64, 4
    $region9: #{tpu_custom_call.1} parent=1 // pred_fallthru
      _
    // Predicated region
    $region10: #{tpu_custom_call.1} parent=1 // pred_check
      _
    $region11: #{tpu_custom_call.1} parent=1 // pred_check_branch
      %41 = sbr.rel (0) target = $region13
    $region12: #{tpu_custom_call.1} parent=1 // pred_region
      _
    $region13: #{tpu_custom_call.1} parent=1 // pred_fallthru
      _
    // Predicated region
    $region14: #{tpu_custom_call.1} parent=1 // pred_check
      _
    $region15: #{tpu_custom_call.1} parent=1 // pred_check_branch
      %43 = sbr.rel (0) target = $region17
    $region16: #{tpu_custom_call.1} parent=1 // pred_region
      %s45 = ssub.s32 1024, 1024
      %46 = vsyncadd [#allocation7], %s45
      %s47 = sshll.u32 [#allocation8], 4
      %s48 = int_to_ptr.vmem [resolvable:$true] %s47
      %53 = dma.hbm_to_vmem [thread:$0]  %s3, 1024, %s48, [#allocation7], 64, 64, 4
    $region17: #{tpu_custom_call.1} parent=1 // pred_fallthru
      _
    // Predicated region
    $region18: #{tpu_custom_call.1} parent=1 // pred_check
      _
    $region19: #{tpu_custom_call.1} parent=1 // pred_check_branch
      %55 = sbr.rel (0) target = $region21
    $region20: #{tpu_custom_call.1} parent=1 // pred_region
      _
    $region21: #{tpu_custom_call.1} parent=1 // pred_fallthru
      _
    // Predicated region
    $region22: #{tpu_custom_call.1} parent=1 // pred_check
      _
    $region23: #{tpu_custom_call.1} parent=1 // pred_check_branch
      %57 = sbr.rel (0) target = $region25
    $region24: #{tpu_custom_call.1} parent=1 // pred_region
      %58 = dma.done [#allocation4], 128
    $region25: #{tpu_custom_call.1} parent=1 // pred_fallthru
      _
    // Predicated region
    $region26: #{tpu_custom_call.1} parent=1 // pred_check
      _
    $region27: #{tpu_custom_call.1} parent=1 // pred_check_branch
      %60 = sbr.rel (0) target = $region29
    $region28: #{tpu_custom_call.1} parent=1 // pred_region
      %61 = dma.done [#allocation7], 1024
    $region29: #{tpu_custom_call.1} parent=1 // pred_fallthru
      _
    // Predicated region
    $region30: #{tpu_custom_call.1} parent=1 // pred_check
      _
    $region31: #{tpu_custom_call.1} parent=1 // pred_check_branch
      %63 = sbr.rel (0) target = $region33
    $region32: #{tpu_custom_call.1} parent=1 // pred_region
      %64 = dma.done [#allocation7], 1024
    $region33: #{tpu_custom_call.1} parent=1 // pred_fallthru
      _
    %v66 = vld [vmem:[#allocation3] sm:$0xf]
    %v67 = vld [vmem:[#allocation3 + $0x4] sm:$0xf]
    %v68 = vld [vmem:[#allocation6] sm:$0xf]
    %v69 = vld [vmem:[#allocation6 + $0x4] sm:$0xf]
    %v70 = vld [vmem:[#allocation6 + $0x8] sm:$0xf]
    %v71 = vld [vmem:[#allocation6 + $0xc] sm:$0xf]
    %v72 = vld [vmem:[#allocation6 + $0x10] sm:$0xf]
    %v73 = vld [vmem:[#allocation6 + $0x14] sm:$0xf]
    %v74 = vld [vmem:[#allocation6 + $0x18] sm:$0xf]
    %v75 = vld [vmem:[#allocation6 + $0x1c] sm:$0xf]
    %v76 = vld [vmem:[#allocation6 + $0x20] sm:$0xf]
    %v77 = vld [vmem:[#allocation6 + $0x24] sm:$0xf]
    %v78 = vld [vmem:[#allocation6 + $0x28] sm:$0xf]
    %v79 = vld [vmem:[#allocation6 + $0x2c] sm:$0xf]
    %v80 = vld [vmem:[#allocation6 + $0x30] sm:$0xf]
    %v81 = vld [vmem:[#allocation6 + $0x34] sm:$0xf]
    %v82 = vld [vmem:[#allocation6 + $0x38] sm:$0xf]
    %v83 = vld [vmem:[#allocation6 + $0x3c] sm:$0xf]
    %v84 = vld [vmem:[%s2] sm:$0x1]
    %v86 = vlaneseq
    %v87 = vshrl.u32 %v86, 7
    %v88 = vsub.s32 0, %v87
    %v89 = vrot.slane %v84, %v88
    %v93 = vunpack.c.l.b16 %v66
    %v94 = vunpack.c.l.b16 %v67
    %v95 = vpack.c.b16 %v94, %v93
    %v113 = vunpack.c.l.b16 %v68
    %v114 = vunpack.c.l.b16 %v69
    %v115 = vunpack.c.l.b16 %v70
    %v116 = vunpack.c.l.b16 %v71
    %v117 = vunpack.c.l.b16 %v72
    %v118 = vunpack.c.l.b16 %v73
    %v119 = vunpack.c.l.b16 %v74
    %v120 = vunpack.c.l.b16 %v75
    %v121 = vunpack.c.l.b16 %v76
    %v122 = vunpack.c.l.b16 %v77
    %v123 = vunpack.c.l.b16 %v78
    %v124 = vunpack.c.l.b16 %v79
    %v125 = vunpack.c.l.b16 %v80
    %v126 = vunpack.c.l.b16 %v81
    %v127 = vunpack.c.l.b16 %v82
    %v128 = vunpack.c.l.b16 %v83
    %v129 = vpack.c.b16 %v114, %v113
    %v130 = vpack.c.b16 %v116, %v115
    %v131 = vpack.c.b16 %v118, %v117
    %v132 = vpack.c.b16 %v120, %v119
    %v133 = vpack.c.b16 %v122, %v121
    %v134 = vpack.c.b16 %v124, %v123
    %v135 = vpack.c.b16 %v126, %v125
    %v136 = vpack.c.b16 %v128, %v127
    %145 = vmatprep.subr.bf16.mxu0 0
    %146 = vmatpush1.bf16.msra.mxu0 %v129
    %147 = vmatprep.subr.bf16.mxu0 0
    %148 = vmatpush1.bf16.msra.mxu0 %v130
    %149 = vmatprep.subr.bf16.mxu0 0
    %150 = vmatpush1.bf16.msra.mxu0 %v131
    %151 = vmatprep.subr.bf16.mxu0 0
    %152 = vmatpush1.bf16.msra.mxu0 %v132
    %153 = vmatprep.subr.bf16.mxu0 0
    %154 = vmatpush1.bf16.msra.mxu0 %v133
    %155 = vmatprep.subr.bf16.mxu0 0
    %156 = vmatpush1.bf16.msra.mxu0 %v134
    %157 = vmatprep.subr.bf16.mxu0 0
    %158 = vmatpush1.bf16.msra.mxu0 %v135
    %159 = vmatprep.subr.bf16.mxu0 0
    %160 = vmatpush1.bf16.msra.mxu0 %v136
    %161 = vmatprep.subr.bf16.mxu0 0
    %162 = vmatpush1.bf16.msra.mxu0 0
    %163 = vmatprep.subr.bf16.mxu0 0
    %164 = vmatpush1.bf16.msra.mxu0 0
    %165 = vmatprep.subr.bf16.mxu0 0
    %166 = vmatpush1.bf16.msra.mxu0 0
    %167 = vmatprep.subr.bf16.mxu0 0
    %168 = vmatpush1.bf16.msra.mxu0 0
    %169 = vmatprep.subr.bf16.mxu0 0
    %170 = vmatpush1.bf16.msra.mxu0 0
    %171 = vmatprep.subr.bf16.mxu0 0
    %172 = vmatpush1.bf16.msra.mxu0 0
    %173 = vmatprep.subr.bf16.mxu0 0
    %174 = vmatpush1.bf16.msra.mxu0 0
    %175 = vmatprep.subr.bf16.mxu0 0
    %176 = vmatpush1.bf16.msra.mxu0 0
    %177 = vmatprep.mubr.bf16.mxu0 0
    %178 = vmatmul.mubr.bf16.gmra.mrb[0].mxu0 %v95
    %v179 = vpop.f32.mrb[0].mxu0
    %v180 = vadd.f32 %v89, %v179
    %v181 = vpop.f32.mrb[0].mxu0
    %v182 = vpop.f32.mrb[0].mxu0
    %v183 = vadd.f32 %v89, %v182
    %v184 = vpop.f32.mrb[0].mxu0
    %185 = vdwg.mxu0
    %v186 = vmul.f32 %v180, 0.5
    %v187 = vmul.f32 %v183, 0.5
    %v188 = vtanh.pop %v186
    %v189 = vtanh.pop %v187
    %v190 = vadd.f32 %v188, 1.0
    %v191 = vadd.f32 %v189, 1.0
    %v192 = vmul.f32 %v190, 0.5
    %v193 = vmul.f32 %v191, 0.5
    %v194 = vadd.f32 %v192, %v193
    %v195 = vrot.slane %v194, 4
    %v196 = vadd.f32 %v194, %v195
    %v197 = vrot.slane %v196, 2
    %v198 = vadd.f32 %v196, %v197
    %v199 = vrot.slane %v198, 1
    %v200 = vadd.f32 %v198, %v199
    %201 = vst [vmem:[#allocation10] sm:$0x1] %v200
    %v202 = vpack.c.bf16 %v193, %v192
    %v203 = vld [vmem:[#allocation8] sm:$0xf]
    %v204 = vld [vmem:[#allocation8 + $0x4] sm:$0xf]
    %v205 = vld [vmem:[#allocation8 + $0x8] sm:$0xf]
    %v206 = vld [vmem:[#allocation8 + $0xc] sm:$0xf]
    %v207 = vld [vmem:[#allocation8 + $0x10] sm:$0xf]
    %v208 = vld [vmem:[#allocation8 + $0x14] sm:$0xf]
    %v209 = vld [vmem:[#allocation8 + $0x18] sm:$0xf]
    %v210 = vld [vmem:[#allocation8 + $0x1c] sm:$0xf]
    %v211 = vld [vmem:[#allocation8 + $0x20] sm:$0xf]
    %v212 = vld [vmem:[#allocation8 + $0x24] sm:$0xf]
    %v213 = vld [vmem:[#allocation8 + $0x28] sm:$0xf]
    %v214 = vld [vmem:[#allocation8 + $0x2c] sm:$0xf]
    %v215 = vld [vmem:[#allocation8 + $0x30] sm:$0xf]
    %v216 = vld [vmem:[#allocation8 + $0x34] sm:$0xf]
    %v217 = vld [vmem:[#allocation8 + $0x38] sm:$0xf]
    %v218 = vld [vmem:[#allocation8 + $0x3c] sm:$0xf]
    %v235 = vunpack.c.l.b16 %v203
    %v236 = vunpack.c.l.b16 %v204
    %v237 = vunpack.c.l.b16 %v205
    %v238 = vunpack.c.l.b16 %v206
    %v239 = vunpack.c.l.b16 %v207
    %v240 = vunpack.c.l.b16 %v208
    %v241 = vunpack.c.l.b16 %v209
    %v242 = vunpack.c.l.b16 %v210
    %v243 = vunpack.c.l.b16 %v211
    %v244 = vunpack.c.l.b16 %v212
    %v245 = vunpack.c.l.b16 %v213
    %v246 = vunpack.c.l.b16 %v214
    %v247 = vunpack.c.l.b16 %v215
    %v248 = vunpack.c.l.b16 %v216
    %v249 = vunpack.c.l.b16 %v217
    %v250 = vunpack.c.l.b16 %v218
    %v251 = vpack.c.b16 %v236, %v235
    %v252 = vpack.c.b16 %v238, %v237
    %v253 = vpack.c.b16 %v240, %v239
    %v254 = vpack.c.b16 %v242, %v241
    %v255 = vpack.c.b16 %v244, %v243
    %v256 = vpack.c.b16 %v246, %v245
    %v257 = vpack.c.b16 %v248, %v247
    %v258 = vpack.c.b16 %v250, %v249
    %267 = vmatprep.subr.bf16.mxu0 0
    %268 = vmatpush1.bf16.msra.mxu0 %v251
    %269 = vmatprep.subr.bf16.mxu0 0
    %270 = vmatpush1.bf16.msra.mxu0 %v252
    %271 = vmatprep.subr.bf16.mxu0 0
    %272 = vmatpush1.bf16.msra.mxu0 %v253
    %273 = vmatprep.subr.bf16.mxu0 0
    %274 = vmatpush1.bf16.msra.mxu0 %v254
    %275 = vmatprep.subr.bf16.mxu0 0
    %276 = vmatpush1.bf16.msra.mxu0 %v255
    %277 = vmatprep.subr.bf16.mxu0 0
    %278 = vmatpush1.bf16.msra.mxu0 %v256
    %279 = vmatprep.subr.bf16.mxu0 0
    %280 = vmatpush1.bf16.msra.mxu0 %v257
    %281 = vmatprep.subr.bf16.mxu0 0
    %282 = vmatpush1.bf16.msra.mxu0 %v258
    %283 = vmatprep.subr.bf16.mxu0 0
    %284 = vmatpush1.bf16.msra.mxu0 0
    %285 = vmatprep.subr.bf16.mxu0 0
    %286 = vmatpush1.bf16.msra.mxu0 0
    %287 = vmatprep.subr.bf16.mxu0 0
    %288 = vmatpush1.bf16.msra.mxu0 0
    %289 = vmatprep.subr.bf16.mxu0 0
    %290 = vmatpush1.bf16.msra.mxu0 0
    %291 = vmatprep.subr.bf16.mxu0 0
    %292 = vmatpush1.bf16.msra.mxu0 0
    %293 = vmatprep.subr.bf16.mxu0 0
    %294 = vmatpush1.bf16.msra.mxu0 0
    %295 = vmatprep.subr.bf16.mxu0 0
    %296 = vmatpush1.bf16.msra.mxu0 0
    %297 = vmatprep.subr.bf16.mxu0 0
    %298 = vmatpush1.bf16.msra.mxu0 0
    %299 = vmatprep.mubr.bf16.mxu0 0
    %300 = vmatmul.mubr.bf16.gmra.mrb[0].mxu0 %v202
    %v301 = vpop.f32.mrb[0].mxu0
    %v302 = vadd.f32 0.0, %v301
    %v303 = vpop.f32.mrb[0].mxu0
    %v304 = vpop.f32.mrb[0].mxu0
    %v305 = vadd.f32 0.0, %v304
    %v306 = vpop.f32.mrb[0].mxu0
    %307 = vdwg.mxu0
    %p308 = scmp.eq.s32.totalorder 0, 0
    // Predicated region
    $region34: #{tpu_custom_call.1} parent=1 // pred_check
      %p309 = pneg %p308
    $region35: #{tpu_custom_call.1} parent=1 // pred_check_branch
      %311 = sbr.rel (%p309) target = $region37
    $region36: #{tpu_custom_call.1} parent=1 // pred_region
      %312 = vst [vmem:[#allocation2] sm:$0xff] 0.0
      %313 = vst [vmem:[#allocation2 + $0x8] sm:$0xff] 0.0
    $region37: #{tpu_custom_call.1} parent=1 // pred_fallthru
      _
    %v314 = vld [vmem:[#allocation2] sm:$0xff]
    %v315 = vld [vmem:[#allocation2 + $0x8] sm:$0xff]
    %v316 = vadd.f32 %v314, %v302
    %v317 = vadd.f32 %v315, %v305
    %p318 = scmp.lt.s32.totalorder 0, 0
    // Predicated region
    $region38: #{tpu_custom_call.1} parent=1 // pred_check
      %p319 = pneg %p318
    $region39: #{tpu_custom_call.1} parent=1 // pred_check_branch
      %321 = sbr.rel (%p319) target = $region41
    $region40: #{tpu_custom_call.1} parent=1 // pred_region
      %322 = vst [vmem:[#allocation2] sm:$0xff] %v316
      %323 = vst [vmem:[#allocation2 + $0x8] sm:$0xff] %v317
    $region41: #{tpu_custom_call.1} parent=1 // pred_fallthru
      _
    // Predicated region
    $region42: #{tpu_custom_call.1} parent=1 // pred_check
      %p324 = pneg %p308
    $region43: #{tpu_custom_call.1} parent=1 // pred_check_branch
      %326 = sbr.rel (%p324) target = $region45
    $region44: #{tpu_custom_call.1} parent=1 // pred_region
      %v327 = vld [vmem:[%s4] sm:$0x1]
      %v329 = vlaneseq
      %v330 = vshrl.u32 %v329, 7
      %v331 = vsub.s32 0, %v330
      %v332 = vrot.slane %v327, %v331
      %v334 = vadd.f32 %v316, %v332
      %v335 = vadd.f32 %v317, %v332
      %v336 = vtanh.pop %v334
      %v337 = vtanh.pop %v335
      %338 = vst [vmem:[#allocation9] sm:$0xff] %v336
      %339 = vst [vmem:[#allocation9 + $0x8] sm:$0xff] %v337
    $region45: #{tpu_custom_call.1} parent=1 // pred_fallthru
      _
    // Predicated region
    $region46: #{tpu_custom_call.1} parent=1 // pred_check
      _
    $region47: #{tpu_custom_call.1} parent=1 // pred_check_branch
      %341 = sbr.rel (0) target = $region49
    $region48: #{tpu_custom_call.1} parent=1 // pred_region
      %s343 = ssub.s32 256, 256
      %344 = vsyncadd [#allocation5], %s343
      %s345 = sshll.u32 [#allocation9], 4
      %s346 = int_to_ptr.vmem [resolvable:$true] %s345
      %351 = dma.vmem_to_hbm [thread:$0]  %s346, 256, %s5, [#allocation5], 128, 128, 8
    $region49: #{tpu_custom_call.1} parent=1 // pred_fallthru
      _
    // Predicated region
    $region50: #{tpu_custom_call.1} parent=1 // pred_check
      _
    $region51: #{tpu_custom_call.1} parent=1 // pred_check_branch
      %353 = sbr.rel (0) target = $region53
    $region52: #{tpu_custom_call.1} parent=1 // pred_region
      %s355 = ssub.s32 16, 16
      %356 = vsyncadd [#allocation11], %s355
      %s358 = sshll.u32 [#allocation10], 4
      %s359 = int_to_ptr.vmem [resolvable:$true] %s358
      %361 = dma.vmem_to_hbm [thread:$0]  %s359, 16, %s6, [#allocation11]
    $region53: #{tpu_custom_call.1} parent=1 // pred_fallthru
      _
    // Predicated region
    $region54: #{tpu_custom_call.1} parent=1 // pred_check
      _
    $region55: #{tpu_custom_call.1} parent=1 // pred_check_branch
      %363 = sbr.rel (0) target = $region57
    $region56: #{tpu_custom_call.1} parent=1 // pred_region
      %364 = dma.done [#allocation5], 256
    $region57: #{tpu_custom_call.1} parent=1 // pred_fallthru
      _
    // Predicated region
    $region58: #{tpu_custom_call.1} parent=1 // pred_check
      _
    $region59: #{tpu_custom_call.1} parent=1 // pred_check_branch
      %366 = sbr.rel (0) target = $region61
    $region60: #{tpu_custom_call.1} parent=1 // pred_region
      %367 = dma.done [#allocation11], 16
    $region61: #{tpu_custom_call.1} parent=1 // pred_fallthru
      _
    %368 = vsyncpa [#allocation4], 1
    %369 = vsyncpa [#allocation7], 1
    %370 = vsyncpa [#allocation5], 1
    %371 = vsyncpa [#allocation11], 1

// kernel: tpu_custom_call.1
$region0: #{tpu_custom_call.1}
  #allocation0 [shape = 'u32[]', space=smem, size = 0x4, offset = 0x4, fixed_abs, tag = 'smem constant byte address 0x4 - core index']
  #allocation1 [shape = 'u32[144,128]{1,0:T(1,128)}', space=vmem, size = 0x12000, scoped, tag = 'internal scratch']
  #allocation2 [shape = 'f32[16,128]{1,0:T(8,128)}', space=vmem, size = 0x2000, scoped, tag = 'scratch operand']
  %s0 = inlined_call_operand.hbm [shape: bf16[16,128], index: 0, kind: input, shape index: {}]
  %s1 = inlined_call_operand.hbm [shape: bf16[128,128], index: 1, kind: input, shape index: {}]
  %s2 = inlined_call_operand.vmem [shape: f32[1,128], index: 2, kind: input, shape index: {}]
  %s3 = inlined_call_operand.hbm [shape: bf16[128,128], index: 3, kind: input, shape index: {}]
  %s4 = inlined_call_operand.vmem [shape: f32[1,128], index: 4, kind: input, shape index: {}]
  %s5 = inlined_call_operand.hbm [shape: f32[16,128], index: 5, kind: output, shape index: {0}]
  %s6 = inlined_call_operand.hbm [shape: f32[1,1,128], index: 6, kind: output, shape index: {1}]
  %7 = xla_tuple %s5, %s6
  %s8 = sld [smem:[#allocation0]]
  $region62: #{tpu_custom_call.1} parent=0
    _
  %s10 = ssub.s32 1, %s8
  %s11 = scalar_select 0, %s10, %s8
  $region1: #{tpu_custom_call.1} parent=0
    #allocation3 [shape = 'u8[4096]{0}', space=vmem, size = 0x1000, scoped, tag = 'input window, operand 0, single buffered']
    #allocation4 [shape = 's32[1]{0}', space=sflag, size = 0x4, scoped, tag = 'scoped memory for tpu_custom_call.1']
    #allocation5 [shape = 's32[1]{0}', space=sflag, size = 0x4, scoped, tag = 'scoped memory for tpu_custom_call.1']
    #allocation6 [shape = 'u8[32768]{0}', space=vmem, size = 0x8000, scoped, tag = 'input window, operand 1, single buffered']
    #allocation7 [shape = 's32[1]{0}', space=sflag, size = 0x4, scoped, tag = 'scoped memory for tpu_custom_call.1']
    #allocation8 [shape = 'u8[32768]{0}', space=vmem, size = 0x8000, scoped, tag = 'input window, operand 3, single buffered']
    #allocation9 [shape = 'u8[8192]{0}', space=vmem, size = 0x2000, scoped, tag = 'output window, operand 0, single buffered']
    #allocation10 [shape = 'u8[512]{0}', space=vmem, size = 0x400, scoped, tag = 'output window, operand 1, single buffered']
    #allocation11 [shape = 's32[1]{0}', space=sflag, size = 0x4, scoped, tag = 'scoped memory for tpu_custom_call.1']
    %12 = vsyncpa [#allocation4], 0
    %13 = vsyncpa [#allocation7], 0
    %14 = vsyncpa [#allocation5], 0
    %15 = vsyncpa [#allocation11], 0
    // Predicated region
    $region2: #{tpu_custom_call.1} parent=1 // pred_check
      _
    $region3: #{tpu_custom_call.1} parent=1 // pred_check_branch
      %17 = sbr.rel (0) target = $region5
    $region4: #{tpu_custom_call.1} parent=1 // pred_region
      %s19 = ssub.s32 128, 128
      %20 = vsyncadd [#allocation4], %s19
      %s21 = sshll.u32 [#allocation3], 4
      %s22 = int_to_ptr.vmem [resolvable:$true] %s21
      %27 = dma.hbm_to_vmem [thread:$0]  %s0, 128, %s22, [#allocation4], 64, 64, 4
    $region5: #{tpu_custom_call.1} parent=1 // pred_fallthru
      _
    // Predicated region
    $region6: #{tpu_custom_call.1} parent=1 // pred_check
      _
    $region7: #{tpu_custom_call.1} parent=1 // pred_check_branch
      %29 = sbr.rel (0) target = $region9
    $region8: #{tpu_custom_call.1} parent=1 // pred_region
      %s31 = ssub.s32 1024, 1024
      %32 = vsyncadd [#allocation7], %s31
      %s33 = sshll.u32 [#allocation6], 4
      %s34 = int_to_ptr.vmem [resolvable:$true] %s33
      %39 = dma.hbm_to_vmem [thread:$0]  %s1, 1024, %s34, [#allocation7], 64, 64, 4
    $region9: #{tpu_custom_call.1} parent=1 // pred_fallthru
      _
    // Predicated region
    $region10: #{tpu_custom_call.1} parent=1 // pred_check
      _
    $region11: #{tpu_custom_call.1} parent=1 // pred_check_branch
      %41 = sbr.rel (0) target = $region13
    $region12: #{tpu_custom_call.1} parent=1 // pred_region
      _
    $region13: #{tpu_custom_call.1} parent=1 // pred_fallthru
      _
    // Predicated region
    $region14: #{tpu_custom_call.1} parent=1 // pred_check
      _
    $region15: #{tpu_custom_call.1} parent=1 // pred_check_branch
      %43 = sbr.rel (0) target = $region17
    $region16: #{tpu_custom_call.1} parent=1 // pred_region
      %s45 = ssub.s32 1024, 1024
      %46 = vsyncadd [#allocation7], %s45
      %s47 = sshll.u32 [#allocation8], 4
      %s48 = int_to_ptr.vmem [resolvable:$true] %s47
      %53 = dma.hbm_to_vmem [thread:$0]  %s3, 1024, %s48, [#allocation7], 64, 64, 4
    $region17: #{tpu_custom_call.1} parent=1 // pred_fallthru
      _
    // Predicated region
    $region18: #{tpu_custom_call.1} parent=1 // pred_check
      _
    $region19: #{tpu_custom_call.1} parent=1 // pred_check_branch
      %55 = sbr.rel (0) target = $region21
    $region20: #{tpu_custom_call.1} parent=1 // pred_region
      _
    $region21: #{tpu_custom_call.1} parent=1 // pred_fallthru
      _
    // Predicated region
    $region22: #{tpu_custom_call.1} parent=1 // pred_check
      _
    $region23: #{tpu_custom_call.1} parent=1 // pred_check_branch
      %57 = sbr.rel (0) target = $region25
    $region24: #{tpu_custom_call.1} parent=1 // pred_region
      %58 = dma.done [#allocation4], 128
    $region25: #{tpu_custom_call.1} parent=1 // pred_fallthru
      _
    // Predicated region
    $region26: #{tpu_custom_call.1} parent=1 // pred_check
      _
    $region27: #{tpu_custom_call.1} parent=1 // pred_check_branch
      %60 = sbr.rel (0) target = $region29
    $region28: #{tpu_custom_call.1} parent=1 // pred_region
      %61 = dma.done [#allocation7], 1024
    $region29: #{tpu_custom_call.1} parent=1 // pred_fallthru
      _
    // Predicated region
    $region30: #{tpu_custom_call.1} parent=1 // pred_check
      _
    $region31: #{tpu_custom_call.1} parent=1 // pred_check_branch
      %63 = sbr.rel (0) target = $region33
    $region32: #{tpu_custom_call.1} parent=1 // pred_region
      %64 = dma.done [#allocation7], 1024
    $region33: #{tpu_custom_call.1} parent=1 // pred_fallthru
      _
    %v66 = vld [vmem:[#allocation3] sm:$0xf]
    %v67 = vld [vmem:[#allocation3 + $0x4] sm:$0xf]
    %v68 = vld [vmem:[#allocation6] sm:$0xf]
    %v69 = vld [vmem:[#allocation6 + $0x4] sm:$0xf]
    %v70 = vld [vmem:[#allocation6 + $0x8] sm:$0xf]
    %v71 = vld [vmem:[#allocation6 + $0xc] sm:$0xf]
    %v72 = vld [vmem:[#allocation6 + $0x10] sm:$0xf]
    %v73 = vld [vmem:[#allocation6 + $0x14] sm:$0xf]
    %v74 = vld [vmem:[#allocation6 + $0x18] sm:$0xf]
    %v75 = vld [vmem:[#allocation6 + $0x1c] sm:$0xf]
    %v76 = vld [vmem:[#allocation6 + $0x20] sm:$0xf]
    %v77 = vld [vmem:[#allocation6 + $0x24] sm:$0xf]
    %v78 = vld [vmem:[#allocation6 + $0x28] sm:$0xf]
    %v79 = vld [vmem:[#allocation6 + $0x2c] sm:$0xf]
    %v80 = vld [vmem:[#allocation6 + $0x30] sm:$0xf]
    %v81 = vld [vmem:[#allocation6 + $0x34] sm:$0xf]
    %v82 = vld [vmem:[#allocation6 + $0x38] sm:$0xf]
    %v83 = vld [vmem:[#allocation6 + $0x3c] sm:$0xf]
    %v84 = vld [vmem:[%s2] sm:$0x1]
    %v86 = vlaneseq
    %v87 = vshrl.u32 %v86, 7
    %v88 = vsub.s32 0, %v87
    %v89 = vrot.slane %v84, %v88
    %v93 = vunpack.c.l.b16 %v66
    %v94 = vunpack.c.l.b16 %v67
    %v95 = vpack.c.b16 %v94, %v93
    %v113 = vunpack.c.l.b16 %v68
    %v114 = vunpack.c.l.b16 %v69
    %v115 = vunpack.c.l.b16 %v70
    %v116 = vunpack.c.l.b16 %v71
    %v117 = vunpack.c.l.b16 %v72
    %v118 = vunpack.c.l.b16 %v73
    %v119 = vunpack.c.l.b16 %v74
    %v120 = vunpack.c.l.b16 %v75
    %v121 = vunpack.c.l.b16 %v76
    %v122 = vunpack.c.l.b16 %v77
    %v123 = vunpack.c.l.b16 %v78
    %v124 = vunpack.c.l.b16 %v79
    %v125 = vunpack.c.l.b16 %v80
    %v126 = vunpack.c.l.b16 %v81
    %v127 = vunpack.c.l.b16 %v82
    %v128 = vunpack.c.l.b16 %v83
    %v129 = vpack.c.b16 %v114, %v113
    %v130 = vpack.c.b16 %v116, %v115
    %v131 = vpack.c.b16 %v118, %v117
    %v132 = vpack.c.b16 %v120, %v119
    %v133 = vpack.c.b16 %v122, %v121
    %v134 = vpack.c.b16 %v124, %v123
    %v135 = vpack.c.b16 %v126, %v125
    %v136 = vpack.c.b16 %v128, %v127
    %145 = vmatprep.subr.bf16.mxu0 0
    %146 = vmatpush1.bf16.msra.mxu0 %v129
    %147 = vmatprep.subr.bf16.mxu0 0
    %148 = vmatpush1.bf16.msra.mxu0 %v130
    %149 = vmatprep.subr.bf16.mxu0 0
    %150 = vmatpush1.bf16.msra.mxu0 %v131
    %151 = vmatprep.subr.bf16.mxu0 0
    %152 = vmatpush1.bf16.msra.mxu0 %v132
    %153 = vmatprep.subr.bf16.mxu0 0
    %154 = vmatpush1.bf16.msra.mxu0 %v133
    %155 = vmatprep.subr.bf16.mxu0 0
    %156 = vmatpush1.bf16.msra.mxu0 %v134
    %157 = vmatprep.subr.bf16.mxu0 0
    %158 = vmatpush1.bf16.msra.mxu0 %v135
    %159 = vmatprep.subr.bf16.mxu0 0
    %160 = vmatpush1.bf16.msra.mxu0 %v136
    %161 = vmatprep.subr.bf16.mxu0 0
    %162 = vmatpush1.bf16.msra.mxu0 0
    %163 = vmatprep.subr.bf16.mxu0 0
    %164 = vmatpush1.bf16.msra.mxu0 0
    %165 = vmatprep.subr.bf16.mxu0 0
    %166 = vmatpush1.bf16.msra.mxu0 0
    %167 = vmatprep.subr.bf16.mxu0 0
    %168 = vmatpush1.bf16.msra.mxu0 0
    %169 = vmatprep.subr.bf16.mxu0 0
    %170 = vmatpush1.bf16.msra.mxu0 0
    %171 = vmatprep.subr.bf16.mxu0 0
    %172 = vmatpush1.bf16.msra.mxu0 0
    %173 = vmatprep.subr.bf16.mxu0 0
    %174 = vmatpush1.bf16.msra.mxu0 0
    %175 = vmatprep.subr.bf16.mxu0 0
    %176 = vmatpush1.bf16.msra.mxu0 0
    %177 = vmatprep.mubr.bf16.mxu0 0
    %178 = vmatmul.mubr.bf16.gmra.mrb[0].mxu0 %v95
    %v179 = vpop.f32.mrb[0].mxu0
    %v180 = vadd.f32 %v89, %v179
    %v181 = vpop.f32.mrb[0].mxu0
    %v182 = vpop.f32.mrb[0].mxu0
    %v183 = vadd.f32 %v89, %v182
    %v184 = vpop.f32.mrb[0].mxu0
    %185 = vdwg.mxu0
    %v186 = vmul.f32 %v180, 0.5
    %v187 = vmul.f32 %v183, 0.5
    %v188 = vtanh.pop %v186
    %v189 = vtanh.pop %v187
    %v190 = vadd.f32 %v188, 1.0
    %v191 = vadd.f32 %v189, 1.0
    %v192 = vmul.f32 %v190, 0.5
    %v193 = vmul.f32 %v191, 0.5
    %v194 = vadd.f32 %v192, %v193
    %v195 = vrot.slane %v194, 4
    %v196 = vadd.f32 %v194, %v195
    %v197 = vrot.slane %v196, 2
    %v198 = vadd.f32 %v196, %v197
    %v199 = vrot.slane %v198, 1
    %v200 = vadd.f32 %v198, %v199
    %201 = vst [vmem:[#allocation10] sm:$0x1] %v200
    %v202 = vpack.c.bf16 %v193, %v192
    %v203 = vld [vmem:[#allocation8] sm:$0xf]
    %v204 = vld [vmem:[#allocation8 + $0x4] sm:$0xf]
    %v205 = vld [vmem:[#allocation8 + $0x8] sm:$0xf]
    %v206 = vld [vmem:[#allocation8 + $0xc] sm:$0xf]
    %v207 = vld [vmem:[#allocation8 + $0x10] sm:$0xf]
    %v208 = vld [vmem:[#allocation8 + $0x14] sm:$0xf]
    %v209 = vld [vmem:[#allocation8 + $0x18] sm:$0xf]
    %v210 = vld [vmem:[#allocation8 + $0x1c] sm:$0xf]
    %v211 = vld [vmem:[#allocation8 + $0x20] sm:$0xf]
    %v212 = vld [vmem:[#allocation8 + $0x24] sm:$0xf]
    %v213 = vld [vmem:[#allocation8 + $0x28] sm:$0xf]
    %v214 = vld [vmem:[#allocation8 + $0x2c] sm:$0xf]
    %v215 = vld [vmem:[#allocation8 + $0x30] sm:$0xf]
    %v216 = vld [vmem:[#allocation8 + $0x34] sm:$0xf]
    %v217 = vld [vmem:[#allocation8 + $0x38] sm:$0xf]
    %v218 = vld [vmem:[#allocation8 + $0x3c] sm:$0xf]
    %v235 = vunpack.c.l.b16 %v203
    %v236 = vunpack.c.l.b16 %v204
    %v237 = vunpack.c.l.b16 %v205
    %v238 = vunpack.c.l.b16 %v206
    %v239 = vunpack.c.l.b16 %v207
    %v240 = vunpack.c.l.b16 %v208
    %v241 = vunpack.c.l.b16 %v209
    %v242 = vunpack.c.l.b16 %v210
    %v243 = vunpack.c.l.b16 %v211
    %v244 = vunpack.c.l.b16 %v212
    %v245 = vunpack.c.l.b16 %v213
    %v246 = vunpack.c.l.b16 %v214
    %v247 = vunpack.c.l.b16 %v215
    %v248 = vunpack.c.l.b16 %v216
    %v249 = vunpack.c.l.b16 %v217
    %v250 = vunpack.c.l.b16 %v218
    %v251 = vpack.c.b16 %v236, %v235
    %v252 = vpack.c.b16 %v238, %v237
    %v253 = vpack.c.b16 %v240, %v239
    %v254 = vpack.c.b16 %v242, %v241
    %v255 = vpack.c.b16 %v244, %v243
    %v256 = vpack.c.b16 %v246, %v245
    %v257 = vpack.c.b16 %v248, %v247
    %v258 = vpack.c.b16 %v250, %v249
    %267 = vmatprep.subr.bf16.mxu0 0
    %268 = vmatpush1.bf16.msra.mxu0 %v251
    %269 = vmatprep.subr.bf16.mxu0 0
    %270 = vmatpush1.bf16.msra.mxu0 %v252
    %271 = vmatprep.subr.bf16.mxu0 0
    %272 = vmatpush1.bf16.msra.mxu0 %v253
    %273 = vmatprep.subr.bf16.mxu0 0
    %274 = vmatpush1.bf16.msra.mxu0 %v254
    %275 = vmatprep.subr.bf16.mxu0 0
    %276 = vmatpush1.bf16.msra.mxu0 %v255
    %277 = vmatprep.subr.bf16.mxu0 0
    %278 = vmatpush1.bf16.msra.mxu0 %v256
    %279 = vmatprep.subr.bf16.mxu0 0
    %280 = vmatpush1.bf16.msra.mxu0 %v257
    %281 = vmatprep.subr.bf16.mxu0 0
    %282 = vmatpush1.bf16.msra.mxu0 %v258
    %283 = vmatprep.subr.bf16.mxu0 0
    %284 = vmatpush1.bf16.msra.mxu0 0
    %285 = vmatprep.subr.bf16.mxu0 0
    %286 = vmatpush1.bf16.msra.mxu0 0
    %287 = vmatprep.subr.bf16.mxu0 0
    %288 = vmatpush1.bf16.msra.mxu0 0
    %289 = vmatprep.subr.bf16.mxu0 0
    %290 = vmatpush1.bf16.msra.mxu0 0
    %291 = vmatprep.subr.bf16.mxu0 0
    %292 = vmatpush1.bf16.msra.mxu0 0
    %293 = vmatprep.subr.bf16.mxu0 0
    %294 = vmatpush1.bf16.msra.mxu0 0
    %295 = vmatprep.subr.bf16.mxu0 0
    %296 = vmatpush1.bf16.msra.mxu0 0
    %297 = vmatprep.subr.bf16.mxu0 0
    %298 = vmatpush1.bf16.msra.mxu0 0
    %299 = vmatprep.mubr.bf16.mxu0 0
    %300 = vmatmul.mubr.bf16.gmra.mrb[0].mxu0 %v202
    %v301 = vpop.f32.mrb[0].mxu0
    %v302 = vadd.f32 0.0, %v301
    %v303 = vpop.f32.mrb[0].mxu0
    %v304 = vpop.f32.mrb[0].mxu0
    %v305 = vadd.f32 0.0, %v304
    %v306 = vpop.f32.mrb[0].mxu0
    %307 = vdwg.mxu0
    %p308 = scmp.eq.s32.totalorder 0, 0
    // Predicated region
    $region34: #{tpu_custom_call.1} parent=1 // pred_check
      %p309 = pneg %p308
    $region35: #{tpu_custom_call.1} parent=1 // pred_check_branch
      %311 = sbr.rel (%p309) target = $region37
    $region36: #{tpu_custom_call.1} parent=1 // pred_region
      %312 = vst [vmem:[#allocation2] sm:$0xff] 0.0
      %313 = vst [vmem:[#allocation2 + $0x8] sm:$0xff] 0.0
    $region37: #{tpu_custom_call.1} parent=1 // pred_fallthru
      _
    %v314 = vld [vmem:[#allocation2] sm:$0xff]
    %v315 = vld [vmem:[#allocation2 + $0x8] sm:$0xff]
    %v316 = vadd.f32 %v314, %v302
    %v317 = vadd.f32 %v315, %v305
    %p318 = scmp.lt.s32.totalorder 0, 0
    // Predicated region
    $region38: #{tpu_custom_call.1} parent=1 // pred_check
      %p319 = pneg %p318
    $region39: #{tpu_custom_call.1} parent=1 // pred_check_branch
      %321 = sbr.rel (%p319) target = $region41
    $region40: #{tpu_custom_call.1} parent=1 // pred_region
      %322 = vst [vmem:[#allocation2] sm:$0xff] %v316
      %323 = vst [vmem:[#allocation2 + $0x8] sm:$0xff] %v317
    $region41: #{tpu_custom_call.1} parent=1 // pred_fallthru
      _
    // Predicated region
    $region42: #{tpu_custom_call.1} parent=1 // pred_check
      %p324 = pneg %p308
    $region43: #{tpu_custom_call.1} parent=1 // pred_check_branch
      %326 = sbr.rel (%p324) target = $region45
    $region44: #{tpu_custom_call.1} parent=1 // pred_region
      %v327 = vld [vmem:[%s4] sm:$0x1]
      %v329 = vlaneseq
      %v330 = vshrl.u32 %v329, 7
      %v331 = vsub.s32 0, %v330
      %v332 = vrot.slane %v327, %v331
      %v334 = vadd.f32 %v316, %v332
      %v335 = vadd.f32 %v317, %v332
      %v336 = vtanh.pop %v334
      %v337 = vtanh.pop %v335
      %338 = vst [vmem:[#allocation9] sm:$0xff] %v336
      %339 = vst [vmem:[#allocation9 + $0x8] sm:$0xff] %v337
    $region45: #{tpu_custom_call.1} parent=1 // pred_fallthru
      _
    // Predicated region
    $region46: #{tpu_custom_call.1} parent=1 // pred_check
      _
    $region47: #{tpu_custom_call.1} parent=1 // pred_check_branch
      %341 = sbr.rel (0) target = $region49
    $region48: #{tpu_custom_call.1} parent=1 // pred_region
      %s343 = ssub.s32 256, 256
      %344 = vsyncadd [#allocation5], %s343
      %s345 = sshll.u32 [#allocation9], 4
      %s346 = int_to_ptr.vmem [resolvable:$true] %s345
      %351 = dma.vmem_to_hbm [thread:$0]  %s346, 256, %s5, [#allocation5], 128, 128, 8
    $region49: #{tpu_custom_call.1} parent=1 // pred_fallthru
      _
    // Predicated region
    $region50: #{tpu_custom_call.1} parent=1 // pred_check
      _
    $region51: #{tpu_custom_call.1} parent=1 // pred_check_branch
      %353 = sbr.rel (0) target = $region53
    $region52: #{tpu_custom_call.1} parent=1 // pred_region
      %s355 = ssub.s32 16, 16
      %356 = vsyncadd [#allocation11], %s355
      %s358 = sshll.u32 [#allocation10], 4
      %s359 = int_to_ptr.vmem [resolvable:$true] %s358
      %361 = dma.vmem_to_hbm [thread:$0]  %s359, 16, %s6, [#allocation11]
    $region53: #{tpu_custom_call.1} parent=1 // pred_fallthru
      _
    // Predicated region
    $region54: #{tpu_custom_call.1} parent=1 // pred_check
      _
    $region55: #{tpu_custom_call.1} parent=1 // pred_check_branch
      %363 = sbr.rel (0) target = $region57
    $region56: #{tpu_custom_call.1} parent=1 // pred_region
      %364 = dma.done [#allocation5], 256
    $region57: #{tpu_custom_call.1} parent=1 // pred_fallthru
      _
    // Predicated region
    $region58: #{tpu_custom_call.1} parent=1 // pred_check
      _
    $region59: #{tpu_custom_call.1} parent=1 // pred_check_branch
      %366 = sbr.rel (0) target = $region61
    $region60: #{tpu_custom_call.1} parent=1 // pred_region
      %367 = dma.done [#allocation11], 16
    $region61: #{tpu_custom_call.1} parent=1 // pred_fallthru
      _
    %368 = vsyncpa [#allocation4], 1
    %369 = vsyncpa [#allocation7], 1
    %370 = vsyncpa [#allocation5], 1
    %371 = vsyncpa [#allocation11], 1

</llo_original>
